<compile_context>
chip_gen: v5e
topology: v5e:2x2
jax: 0.10.0
libtpu: 0.0.40
codegen_flags: <defaults>
</compile_context>

<pallas_src>
import functools

import jax
import jax.numpy as jnp
from jax.experimental import pallas as pl
from jax.experimental.pallas import tpu as pltpu

MARGIN = 0.85
TAU = 0.25
EPS = 1e-8
NEG_INF = -1e30
CONV_CH = 16
CONV_DILATIONS = (2, 4, 8)

OP_SIGNATURES = {            # gdef.operation_signatures_dict[op][1] (input types)
    'scene': [],
    'filter': ['object_set'],
    'relate': ['object'],
    'intersect': ['object_set', 'object_set'],
    'query': ['object'],
}


def _vmem():
    return pl.BlockSpec(memory_space=pltpu.MemorySpace.VMEM)


def _round_up(x, m):
    return (x + m - 1) // m * m


# ------------------------------ Pallas kernels ------------------------------

def fused_similarity_kernel(feat_ref, w_ref, b_ref, e_ref, bias_ref, t_ref, sim_ref, *, n_attr):
    """Per-attribute concept logits + fused logsumexp over attributes.

    feat (R, D) bf16; w (A, D, H) bf16; b (A, 1, H) f32;
    e (A, H, CL) bf16  (L2-normalised, affine-folded concept embeddings, zero-padded lanes);
    bias (A, 1, CL) f32 (log_belong + margin/tau affine; -1e30 on padded lanes);
    t (A, R, CL) f32   per-attribute logits (lane-dense stores);
    sim (R, CL) f32    logsumexp over attributes (the `filter` logits).
    """
    feat = feat_ref[...]
    sim = None
    for a in range(n_attr):                                       # static, small A
        q = jnp.dot(feat, w_ref[a], preferred_element_type=jnp.float32) + b_ref[a]   # (R, H)
        inv = jax.lax.rsqrt(jnp.sum(q * q, axis=-1, keepdims=True) + EPS)
        qn = (q * inv).astype(jnp.bfloat16)
        ta = jnp.dot(qn, e_ref[a], preferred_element_type=jnp.float32) + bias_ref[a]  # (R, CL)
        t_ref[a] = ta
        if sim is None:
            sim = ta
        else:                                                     # stable logaddexp (VPU/EUP)
            m = jnp.maximum(sim, ta)
            sim = m + jnp.log(jnp.exp(sim - m) + jnp.exp(ta - m))
    sim_ref[...] = sim


def _shift_mats(T, d):
    # Exact zero-"same"-padding shifts, built in-kernel from iota (no operand DMA).
    # (v @ s_m)[.., t] == v[.., t-d] (0 outside);  (v @ s_p)[.., t] == v[.., t+d].
    r = jax.lax.broadcasted_iota(jnp.int32, (T, T), 0)
    c = jax.lax.broadcasted_iota(jnp.int32, (T, T), 1)
    s_m = (c - r == d).astype(jnp.float32)
    s_p = (r - c == d).astype(jnp.float32)
    return s_m, s_p


def conv_temporal_kernel(x_ref, wres_ref, vcol_ref, wlt_ref, bl_ref, o_ref, *, T):
    """Conv1dTemporalProjection; all activations stay in vregs.

    x (1, T) f32; wres (3, 48, 16) tap-stacked residual-block weights;
    vcol (7, 16, 1) = [b1, w1_0, w1_1, w1_2, bm_0, bm_1, bm_2];
    wlt (3, 1, 16) transposed last-conv taps; bl (1, 1); out (1, T).
    """
    f32 = jnp.float32
    x = x_ref[...]                                                # (1, T)
    sm1, sp1 = _shift_mats(T, 1)
    xm = jnp.dot(x, sm1, preferred_element_type=f32)              # x[t-1]
    xp = jnp.dot(x, sp1, preferred_element_type=f32)              # x[t+1]

    # layer1: Conv1d(1 -> 16, k=3, padding=1) + ReLU  (Cin=1 -> pure VPU broadcast-MAC)
    h = vcol_ref[0] + vcol_ref[1] * xm + vcol_ref[2] * x + vcol_ref[3] * xp
    h = jnp.maximum(h, 0.0)                                       # (16, T)

    # dilated residual blocks: h = ReLU(conv_d(h)) + h,  d in (2, 4, 8).
    # One weight matmul per block: u = [W0@h; W1@h; W2@h], then shift tap0/tap2 columns.
    for li, d in enumerate(CONV_DILATIONS):
        smd, spd = _shift_mats(T, d)
        u = jnp.dot(wres_ref[li], h, preferred_element_type=f32)  # (48, T)
        y = (vcol_ref[4 + li]
             + jnp.dot(u[0:CONV_CH], smd, preferred_element_type=f32)
             + u[CONV_CH:2 * CONV_CH]
             + jnp.dot(u[2 * CONV_CH:3 * CONV_CH], spd, preferred_element_type=f32))
        h = jnp.maximum(y, 0.0) + h

    # last conv: Conv1d(16 -> 1, k=3, padding=1)
    hm = jnp.dot(h, sm1, preferred_element_type=f32)
    hp = jnp.dot(h, sp1, preferred_element_type=f32)
    o_ref[...] = (bl_ref[...]
                  + jnp.dot(wlt_ref[0], hm, preferred_element_type=f32)
                  + jnp.dot(wlt_ref[1], h, preferred_element_type=f32)
                  + jnp.dot(wlt_ref[2], hp, preferred_element_type=f32))


# ------------------------------ kernel wrappers ------------------------------

def fused_concept_logits(feat_rows, w_p, b_p, e_p, bias_p, *, n_attr, n_concept):
    """(R0, D) f32 object features -> (attr_logits (A, R0, C), filter logits (R0, C))."""
    R0, D = feat_rows.shape
    R = max(_round_up(R0, 8), 8)                                  # sublane-friendly row count
    CL = e_p.shape[-1]
    feat = jnp.pad(feat_rows.astype(jnp.bfloat16), ((0, R - R0), (0, 0)))
    t, sim = pl.pallas_call(
        functools.partial(fused_similarity_kernel, n_attr=n_attr),
        out_shape=[jax.ShapeDtypeStruct((n_attr, R, CL), jnp.float32),
                   jax.ShapeDtypeStruct((R, CL), jnp.float32)],
        in_specs=[_vmem()] * 5,
        out_specs=[_vmem(), _vmem()],
    )(feat, w_p, b_p, e_p, bias_p)
    return t[:, :R0, :n_concept], sim[:R0, :n_concept]


def conv_temporal_projection(selected, p):
    T = selected.shape[0]
    out = pl.pallas_call(
        functools.partial(conv_temporal_kernel, T=T),
        out_shape=jax.ShapeDtypeStruct((1, T), jnp.float32),
        in_specs=[_vmem()] * 5,
        out_specs=_vmem(),
    )(selected[None, :].astype(jnp.float32), p['wres'], p['vcol'], p['wlT'], p['bl'])
    return out[0]


# ------------------------------ pure-JAX references (spot checks) ------------------------------

def concept_similarity_ref(feat, p):
    acc = None
    for a in range(p['w'].shape[0]):
        q = feat @ p['w'][a] + p['b'][a]
        q = q * jax.lax.rsqrt(jnp.sum(q * q, axis=-1, keepdims=True) + EPS)
        e = p['emb'][a]
        e = e * jax.lax.rsqrt(jnp.sum(e * e, axis=0, keepdims=True) + EPS)
        t = (q @ e - 1.0 + MARGIN) / MARGIN / TAU + p['log_belong'][a]
        acc = t if acc is None else jnp.logaddexp(acc, t)
    return acc


def attribute_query_ref(feat, p, sel):
    rows = []
    for a in range(p['w'].shape[0]):
        q = feat @ p['w'][a] + p['b'][a]
        q = q * jax.lax.rsqrt(jnp.sum(q * q, axis=-1, keepdims=True) + EPS)
        e = p['emb'][a]
        e = e * jax.lax.rsqrt(jnp.sum(e * e, axis=0, keepdims=True) + EPS)
        t = (q @ e - 1.0 + MARGIN) / MARGIN / TAU + p['log_belong'][a]
        rows.append(jnp.sum(t * sel[:, None], axis=0))
    return jnp.stack(rows, axis=0)


def conv_temporal_ref(x, p):
    T = x.shape[0]
    xp = jnp.pad(x[None, :], ((0, 0), (1, 1)))
    h = jnp.zeros((CONV_CH, T), jnp.float32) + p['b1']
    for k in range(3):
        h = h + p['w1'][k] * xp[:, k:k + T]
    h = jnp.maximum(h, 0.0)
    for li, d in enumerate(CONV_DILATIONS):
        hp = jnp.pad(h, ((0, 0), (d, d)))
        y = jnp.zeros((CONV_CH, T), jnp.float32) + p['bm'][li]
        for k in range(3):
            y = y + p['wm'][li, k] @ hp[:, k * d:k * d + T]
        h = jnp.maximum(y, 0.0) + h
    hp = jnp.pad(h, ((0, 0), (1, 1)))
    out = jnp.zeros((1, T), jnp.float32) + p['bl']
    for k in range(3):
        out = out + jnp.sum(p['wl'][k] * hp[:, k:k + T], axis=0, keepdims=True)
    return out[0]


# ------------------------------ parameters ------------------------------

def init_taxonomy_params(key, attributes, concepts, input_dim, hidden_dim):
    A, C, H = len(attributes), len(concepts), hidden_dim
    kw, kb, ke = jax.random.split(key, 3)
    w = 0.1 * jax.random.normal(kw, (A, input_dim, H), jnp.float32)
    b = 0.1 * jax.random.normal(kb, (A, 1, H), jnp.float32)
    emb = 0.1 * jax.random.normal(ke, (A, H, C), jnp.float32)
    belong = jnp.stack(
        [jnp.array([10.0 if attributes[a] == owner else 0.0 for (_, owner) in concepts],
                   jnp.float32) for a in range(A)], axis=0)[:, None, :]     # (A, 1, C)
    log_belong = jax.nn.log_softmax(belong, axis=0)

    # ---- data-independent precompute (hoisted out of the kernel) ----
    CL = _round_up(max(C, 1), 128)                     # lane-dense output width per attribute
    emb_n = emb * jax.lax.rsqrt(jnp.sum(emb * emb, axis=1, keepdims=True) + EPS)
    affine = (MARGIN - 1.0) / (MARGIN * TAU)
    e_p = jnp.zeros((A, H, CL), jnp.float32).at[:, :, :C].set(emb_n / (MARGIN * TAU))
    bias_p = jnp.full((A, 1, CL), NEG_INF, jnp.float32).at[:, :, :C].set(log_belong + affine)
    return dict(w=w, b=b, emb=emb, log_belong=log_belong,
                w_p=w.astype(jnp.bfloat16), b_p=b,
                e_p=e_p.astype(jnp.bfloat16), bias_p=bias_p)


def init_conv_params(key):
    ks = jax.random.split(key, 6)
    w1 = 0.3 * jax.random.normal(ks[0], (3, CONV_CH, 1), jnp.float32)
    b1 = 0.1 * jax.random.normal(ks[1], (CONV_CH, 1), jnp.float32)
    wm = 0.1 * jax.random.normal(ks[2], (3, 3, CONV_CH, CONV_CH), jnp.float32)  # (blk, tap, out, in)
    bm = 0.1 * jax.random.normal(ks[3], (3, CONV_CH, 1), jnp.float32)
    wl = 0.2 * jax.random.normal(ks[4], (3, CONV_CH, 1), jnp.float32)
    bl = 0.1 * jax.random.normal(ks[5], (1, 1), jnp.float32)
    # packed kernel operands (leading-dim indexed slabs; 10 tensors -> 4 operands)
    wres = wm.reshape(3, 3 * CONV_CH, CONV_CH)          # rows [k*16:(k+1)*16] = wm[li, k]
    vcol = jnp.concatenate([b1[None], w1, bm], axis=0)  # (7, 16, 1)
    wlT = jnp.transpose(wl, (0, 2, 1))                  # (3, 1, 16)
    return dict(w1=w1, b1=b1, wm=wm, bm=bm, wl=wl, bl=bl, wres=wres, vcol=vcol, wlT=wlT)


# ------------------------------ executor / module glue ------------------------------

def _freeze(v):
    if isinstance(v, (list, tuple)):
        return tuple(_freeze(x) for x in v)
    if isinstance(v, dict):
        return tuple(sorted((k, _freeze(x)) for k, x in v.items()))
    return v


def _contains_array(v):
    if isinstance(v, (list, tuple)):
        return any(_contains_array(x) for x in v)
    if isinstance(v, dict):
        return any(_contains_array(x) for x in v.values())
    return isinstance(v, jax.Array)


class DifferentiableReasoningPallas:
    """JAX/Pallas equivalent of DifferentiableReasoning (temporal_operator='conv1d', training)."""

    def __init__(self, used_concepts, input_dims, hidden_dims, temporal_operator='conv1d',
                 max_num_segments=5, key=None):
        assert temporal_operator == 'conv1d'
        self.temporal_operator = temporal_operator
        self.max_num_segments = max_num_segments
        ka, kr, kb, kf = jax.random.split(key, 4)
        rec = used_concepts['attribute']
        self.attr_names = list(rec['attributes'])
        self.concept_names = [c for c, _ in rec['concepts']]
        self.attr2idx = {a: i for i, a in enumerate(self.attr_names)}
        self.concept2idx = {c: i for i, c in enumerate(self.concept_names)}
        self.word2idx = dict(self.concept2idx)
        self.n_attr, self.n_concept = len(self.attr_names), len(self.concept_names)
        self.attribute_params = init_taxonomy_params(ka, self.attr_names, rec['concepts'],
                                                     input_dims[1], hidden_dims[1])
        # relation taxonomy built for parity; the temporal relate path never touches it here.
        rrec = used_concepts['relation']
        self.relation_params = init_taxonomy_params(kr, list(rrec['attributes']), rrec['concepts'],
                                                    input_dims[2], hidden_dims[2])
        self.before_params = init_conv_params(kb)
        self.after_params = init_conv_params(kf)
        self._fused = jax.jit(functools.partial(
            fused_concept_logits, n_attr=self.n_attr, n_concept=self.n_concept))
        self._exec_cache = {}                 # (frozen program, n_objects) -> jitted executor

    # ---- similarity path: one fused, batched Pallas call per forward ----
    def _attribute_logits(self, batch_features):
        feats = [f[1] for f in batch_features]
        ns = [int(f.shape[0]) for f in feats]
        n_max = max(ns)
        p = self.attribute_params
        stacked = jnp.stack([jnp.pad(f, ((0, n_max - f.shape[0]), (0, 0))) for f in feats], axis=0)
        rows = stacked.reshape(len(feats) * n_max, -1)
        t_rows, sim_rows = self._fused(rows, p['w_p'], p['b_p'], p['e_p'], p['bias_p'])
        t_all = t_rows.reshape(self.n_attr, len(feats), n_max, self.n_concept)
        sim_all = sim_rows.reshape(len(feats), n_max, self.n_concept)
        return [(sim_all[i], t_all[:, i], ns[i]) for i in range(len(feats))]

    # ---- per-program executor (traced once per program structure, then jitted) ----
    def _program_runner(self, prog, n_objects):
        model = self

        def run(sim_pad, attr_pad):
            concept_logits = sim_pad[:n_objects]                  # (N, C)  filter logits
            attr_logits = attr_pad[:, :n_objects]                 # (A, N, C)
            cg_cache = [None]                                     # per-context caching quirk

            def get_concept_masks(concept_groups):
                if cg_cache[0] is None:
                    masks = []
                    for cg in concept_groups:
                        if isinstance(cg, str):
                            cg = [cg]
                        m = None
                        for c in cg:
                            nm = concept_logits[:, model.concept2idx[c]]
                            m = nm if m is None else jnp.minimum(m, nm)
                        masks.append(m)
                    cg_cache[0] = jnp.stack(masks, axis=0)
                return cg_cache[0]

            buffer = []
            for block_id, block in enumerate(prog):
                op = block['op']
                if op == 'scene':
                    buffer.append(10.0 + jnp.zeros((n_objects,), jnp.float32))
                    continue
                inputs = []
                for inp, inp_type in zip(block['inputs'], OP_SIGNATURES[op]):
                    v = buffer[inp]
                    if inp_type == 'object':
                        v = jax.nn.softmax(v, axis=-1)            # unique()
                    inputs.append(v)
                if op == 'filter':
                    group = block['concept_idx']
                    if group is None:
                        buffer.append(inputs[0])
                    else:
                        mask = get_concept_masks(block['concept_values'])
                        mask = jnp.minimum(inputs[0][None, :], mask)
                        if isinstance(group, int):
                            buffer.append(mask[group])
                        else:
                            buffer.append((mask * group[:, None]).sum(axis=0))
                elif op == 'relate':
                    rel = block['relational_concept']
                    if 'before' in rel:
                        buffer.append(conv_temporal_projection(inputs[0], model.before_params))
                    elif 'after' in rel:
                        buffer.append(conv_temporal_projection(inputs[0], model.after_params))
                    else:
                        raise AssertionError('unknown relational concept')
                elif op == 'intersect':
                    buffer.append(jnp.minimum(inputs[0], inputs[1]))
                else:
                    assert block_id == len(prog) - 1, 'Unexpected query operation: {}'.format(op)
                    if op == 'query':
                        out_all = jnp.einsum('anc,n->ac', attr_logits, inputs[0])     # (A, C)
                        rows = jnp.stack([out_all[model.attr2idx[a]]
                                          for a in block['attribute_values']], axis=0)
                        group = block['attribute_idx']
                        if isinstance(group, int):
                            buffer.append(rows[group])
                        else:
                            buffer.append((rows * group[:, None]).sum(axis=0))
                # training=True and _test_quantize==STANDARD -> quantization branch never fires.
            return buffer

        return run

    def forward(self, batch_features, progs):
        per_item = self._attribute_logits(batch_features)
        programs, buffers, result = [], [], []
        for i, _features in enumerate(batch_features):
            prog = progs[i]
            programs.append(prog)
            sim_pad, attr_pad, n_obj = per_item[i]
            if _contains_array(prog):
                fn = self._program_runner(prog, n_obj)            # rare tensor-group path: eager
            else:
                key = (_freeze(prog), n_obj)
                fn = self._exec_cache.get(key)
                if fn is None:
                    fn = jax.jit(self._program_runner(prog, n_obj))
                    self._exec_cache[key] = fn
            buffer = list(fn(sim_pad, attr_pad))
            for bi, block in enumerate(prog):                     # query returns (tensor, word2idx)
                if block['op'] == 'query':
                    buffer[bi] = (buffer[bi], dict(self.word2idx))
            buffers.append(buffer)
            result.append((prog[-1]['op'], buffer[-1]))
        return programs, buffers, result


# ------------------------------ main ------------------------------

if __name__ == "__main__":
    key = jax.random.PRNGKey(0)
    kmodel, kf1, kr1, kf2, kr2, kchk = jax.random.split(key, 6)
    N, D_ATTR, D_REL, H = 8, 32, 32, 16

    used_concepts = {
        'attribute': {
            'attributes': ['color', 'shape'],
            'concepts': [('red', 'color'), ('green', 'color'),
                         ('cube', 'shape'), ('sphere', 'shape')],
        },
        'relation': {
            'attributes': ['spatial'],
            'concepts': [('before', 'spatial'), ('after', 'spatial')],
        },
    }

    model = DifferentiableReasoningPallas(
        used_concepts, input_dims=[None, D_ATTR, D_REL], hidden_dims=[None, H, H],
        temporal_operator='conv1d', max_num_segments=5, key=kmodel)

    feats1 = [None, jax.random.normal(kf1, (N, D_ATTR), jnp.float32),
              jax.random.normal(kr1, (N, N, D_REL), jnp.float32)]
    feats2 = [None, jax.random.normal(kf2, (N, D_ATTR), jnp.float32),
              jax.random.normal(kr2, (N, N, D_REL), jnp.float32)]

    prog1 = [
        {'op': 'scene', 'inputs': []},
        {'op': 'filter', 'inputs': [0], 'concept_idx': 0,
         'concept_values': [['red'], ['cube', 'green']]},
        {'op': 'relate', 'inputs': [1], 'relational_concept': ['after']},
        {'op': 'intersect', 'inputs': [2, 1]},
        {'op': 'query', 'inputs': [3], 'attribute_idx': 1,
         'attribute_values': ['color', 'shape']},
    ]
    prog2 = [
        {'op': 'scene', 'inputs': []},
        {'op': 'filter', 'inputs': [0], 'concept_idx': 1,
         'concept_values': [['sphere'], ['red']]},
        {'op': 'relate', 'inputs': [1], 'relational_concept': ['before']},
        {'op': 'intersect', 'inputs': [2, 1]},
    ]

    # ---- spot-check the Pallas kernels against pure-JAX f32 references ----
    p = model.attribute_params
    t1, sim_k = model._fused(feats1[1], p['w_p'], p['b_p'], p['e_p'], p['bias_p'])  # (A,N,C),(N,C)
    sim_r = concept_similarity_ref(feats1[1], p)
    # tolerance accommodates the bf16 MXU operands (accumulation / rsqrt / logsumexp are f32)
    assert bool(jnp.allclose(sim_k, sim_r, atol=5e-2, rtol=5e-2)), "similarity kernel mismatch"

    sel = jax.nn.softmax(jax.random.normal(kchk, (N,), jnp.float32))
    q_k = jnp.einsum('anc,n->ac', t1, sel)
    q_r = attribute_query_ref(feats1[1], p, sel)
    assert bool(jnp.allclose(q_k, q_r, atol=5e-2, rtol=5e-2)), "query kernel mismatch"

    conv_k = conv_temporal_projection(sel, model.after_params)
    conv_r = conv_temporal_ref(sel, model.after_params)
    assert bool(jnp.allclose(conv_k, conv_r, atol=2e-2, rtol=2e-2)), "conv1d kernel mismatch"

    # ---- full forward over the 2-item batch ----
    programs, buffers, result = model.forward([feats1, feats2], [prog1, prog2])
    jax.block_until_ready((buffers, result))
    print("KERNEL_OK")
</pallas_src>

<mosaic_0001>
module attributes {stable_mosaic.version = 11 : i64} {
  func.func @fused_similarity_kernel(%arg0: memref<8x32xbf16, #tpu.memory_space<vmem>>, %arg1: memref<2x32x16xbf16, #tpu.memory_space<vmem>>, %arg2: memref<2x1x16xf32, #tpu.memory_space<vmem>>, %arg3: memref<2x16x128xbf16, #tpu.memory_space<vmem>>, %arg4: memref<2x1x128xf32, #tpu.memory_space<vmem>>, %arg5: memref<2x8x128xf32, #tpu.memory_space<vmem>>, %arg6: memref<8x128xf32, #tpu.memory_space<vmem>>) attributes {dimension_semantics = [], scalar_prefetch = 0 : i64, scratch_operands = 0 : i64, tpu.core_type = #tpu.core_type<tc>} {
    %c0 = arith.constant 0 : index
    %c0_0 = arith.constant 0 : index
    %0 = vector.load %arg0[%c0, %c0_0] : memref<8x32xbf16, #tpu.memory_space<vmem>>, vector<8x32xbf16>
    %c0_1 = arith.constant 0 : index
    %c0_2 = arith.constant 0 : index
    %c0_3 = arith.constant 0 : index
    %1 = vector.load %arg1[%c0_1, %c0_2, %c0_3] : memref<2x32x16xbf16, #tpu.memory_space<vmem>>, vector<1x32x16xbf16>
    %2 = vector.shape_cast %1 : vector<1x32x16xbf16> to vector<32x16xbf16>
    %cst = arith.constant dense<0.000000e+00> : vector<8x16xf32>
    %3 = tpu.matmul %0, %2, %cst {dimension_numbers = #tpu.dot_dimension_numbers<[1], [0], [0], [1], [0, 0, 1, 1], [], []>} : vector<8x32xbf16>, vector<32x16xbf16>, vector<8x16xf32> -> vector<8x16xf32>
    %c0_4 = arith.constant 0 : index
    %c0_5 = arith.constant 0 : index
    %c0_6 = arith.constant 0 : index
    %4 = vector.load %arg2[%c0_4, %c0_5, %c0_6] : memref<2x1x16xf32, #tpu.memory_space<vmem>>, vector<1x1x16xf32>
    %5 = vector.shape_cast %4 : vector<1x1x16xf32> to vector<1x16xf32>
    %6 = vector.broadcast %5 : vector<1x16xf32> to vector<8x16xf32>
    %7 = arith.addf %3, %6 : vector<8x16xf32>
    %8 = arith.mulf %7, %7 : vector<8x16xf32>
    %cst_7 = arith.constant dense<0.000000e+00> : vector<8xf32>
    %9 = vector.multi_reduction <add>, %8, %cst_7 [1] : vector<8x16xf32> to vector<8xf32>
    %10 = vector.shape_cast %9 : vector<8xf32> to vector<8x1xf32>
    %cst_8 = arith.constant 9.99999993E-9 : f32
    %11 = vector.broadcast %cst_8 : f32 to vector<8x1xf32>
    %12 = arith.addf %10, %11 : vector<8x1xf32>
    %13 = math.rsqrt %12 : vector<8x1xf32>
    %14 = vector.broadcast %13 : vector<8x1xf32> to vector<8x16xf32>
    %15 = arith.mulf %7, %14 : vector<8x16xf32>
    %16 = arith.truncf %15 : vector<8x16xf32> to vector<8x16xbf16>
    %c0_9 = arith.constant 0 : index
    %c0_10 = arith.constant 0 : index
    %c0_11 = arith.constant 0 : index
    %17 = vector.load %arg3[%c0_9, %c0_10, %c0_11] : memref<2x16x128xbf16, #tpu.memory_space<vmem>>, vector<1x16x128xbf16>
    %18 = vector.shape_cast %17 : vector<1x16x128xbf16> to vector<16x128xbf16>
    %cst_12 = arith.constant dense<0.000000e+00> : vector<8x128xf32>
    %19 = tpu.matmul %16, %18, %cst_12 {dimension_numbers = #tpu.dot_dimension_numbers<[1], [0], [0], [1], [0, 0, 1, 1], [], []>} : vector<8x16xbf16>, vector<16x128xbf16>, vector<8x128xf32> -> vector<8x128xf32>
    %c0_13 = arith.constant 0 : index
    %c0_14 = arith.constant 0 : index
    %c0_15 = arith.constant 0 : index
    %20 = vector.load %arg4[%c0_13, %c0_14, %c0_15] : memref<2x1x128xf32, #tpu.memory_space<vmem>>, vector<1x1x128xf32>
    %21 = vector.shape_cast %20 : vector<1x1x128xf32> to vector<1x128xf32>
    %22 = vector.broadcast %21 : vector<1x128xf32> to vector<8x128xf32>
    %23 = arith.addf %19, %22 : vector<8x128xf32>
    %c0_16 = arith.constant 0 : index
    %c0_17 = arith.constant 0 : index
    %c0_18 = arith.constant 0 : index
    %24 = vector.load %arg5[%c0_16, %c0_17, %c0_18] : memref<2x8x128xf32, #tpu.memory_space<vmem>>, vector<1x8x128xf32>
    %25 = vector.shape_cast %24 : vector<1x8x128xf32> to vector<8x128xf32>
    %26 = vector.shape_cast %23 : vector<8x128xf32> to vector<1x8x128xf32>
    tpu.vector_store %arg5[%c0_16, %c0_17, %c0_18], %26 {strides = array<i32>} : memref<2x8x128xf32, #tpu.memory_space<vmem>>, vector<1x8x128xf32>,
    %c1 = arith.constant 1 : index
    %c0_19 = arith.constant 0 : index
    %c0_20 = arith.constant 0 : index
    %27 = vector.load %arg1[%c1, %c0_19, %c0_20] : memref<2x32x16xbf16, #tpu.memory_space<vmem>>, vector<1x32x16xbf16>
    %28 = vector.shape_cast %27 : vector<1x32x16xbf16> to vector<32x16xbf16>
    %cst_21 = arith.constant dense<0.000000e+00> : vector<8x16xf32>
    %29 = tpu.matmul %0, %28, %cst_21 {dimension_numbers = #tpu.dot_dimension_numbers<[1], [0], [0], [1], [0, 0, 1, 1], [], []>} : vector<8x32xbf16>, vector<32x16xbf16>, vector<8x16xf32> -> vector<8x16xf32>
    %c1_22 = arith.constant 1 : index
    %c0_23 = arith.constant 0 : index
    %c0_24 = arith.constant 0 : index
    %30 = vector.load %arg2[%c1_22, %c0_23, %c0_24] : memref<2x1x16xf32, #tpu.memory_space<vmem>>, vector<1x1x16xf32>
    %31 = vector.shape_cast %30 : vector<1x1x16xf32> to vector<1x16xf32>
    %32 = vector.broadcast %31 : vector<1x16xf32> to vector<8x16xf32>
    %33 = arith.addf %29, %32 : vector<8x16xf32>
    %34 = arith.mulf %33, %33 : vector<8x16xf32>
    %cst_25 = arith.constant dense<0.000000e+00> : vector<8xf32>
    %35 = vector.multi_reduction <add>, %34, %cst_25 [1] : vector<8x16xf32> to vector<8xf32>
    %36 = vector.shape_cast %35 : vector<8xf32> to vector<8x1xf32>
    %cst_26 = arith.constant 9.99999993E-9 : f32
    %37 = vector.broadcast %cst_26 : f32 to vector<8x1xf32>
    %38 = arith.addf %36, %37 : vector<8x1xf32>
    %39 = math.rsqrt %38 : vector<8x1xf32>
    %40 = vector.broadcast %39 : vector<8x1xf32> to vector<8x16xf32>
    %41 = arith.mulf %33, %40 : vector<8x16xf32>
    %42 = arith.truncf %41 : vector<8x16xf32> to vector<8x16xbf16>
    %c1_27 = arith.constant 1 : index
    %c0_28 = arith.constant 0 : index
    %c0_29 = arith.constant 0 : index
    %43 = vector.load %arg3[%c1_27, %c0_28, %c0_29] : memref<2x16x128xbf16, #tpu.memory_space<vmem>>, vector<1x16x128xbf16>
    %44 = vector.shape_cast %43 : vector<1x16x128xbf16> to vector<16x128xbf16>
    %cst_30 = arith.constant dense<0.000000e+00> : vector<8x128xf32>
    %45 = tpu.matmul %42, %44, %cst_30 {dimension_numbers = #tpu.dot_dimension_numbers<[1], [0], [0], [1], [0, 0, 1, 1], [], []>} : vector<8x16xbf16>, vector<16x128xbf16>, vector<8x128xf32> -> vector<8x128xf32>
    %c1_31 = arith.constant 1 : index
    %c0_32 = arith.constant 0 : index
    %c0_33 = arith.constant 0 : index
    %46 = vector.load %arg4[%c1_31, %c0_32, %c0_33] : memref<2x1x128xf32, #tpu.memory_space<vmem>>, vector<1x1x128xf32>
    %47 = vector.shape_cast %46 : vector<1x1x128xf32> to vector<1x128xf32>
    %48 = vector.broadcast %47 : vector<1x128xf32> to vector<8x128xf32>
    %49 = arith.addf %45, %48 : vector<8x128xf32>
    %c1_34 = arith.constant 1 : index
    %c0_35 = arith.constant 0 : index
    %c0_36 = arith.constant 0 : index
    %50 = vector.load %arg5[%c1_34, %c0_35, %c0_36] : memref<2x8x128xf32, #tpu.memory_space<vmem>>, vector<1x8x128xf32>
    %51 = vector.shape_cast %50 : vector<1x8x128xf32> to vector<8x128xf32>
    %52 = vector.shape_cast %49 : vector<8x128xf32> to vector<1x8x128xf32>
    tpu.vector_store %arg5[%c1_34, %c0_35, %c0_36], %52 {strides = array<i32>} : memref<2x8x128xf32, #tpu.memory_space<vmem>>, vector<1x8x128xf32>,
    %53 = arith.maximumf %23, %49 : vector<8x128xf32>
    %54 = arith.subf %23, %53 : vector<8x128xf32>
    %55 = math.exp %54 : vector<8x128xf32>
    %56 = arith.subf %49, %53 : vector<8x128xf32>
    %57 = math.exp %56 : vector<8x128xf32>
    %58 = arith.addf %55, %57 : vector<8x128xf32>
    %59 = math.log %58 : vector<8x128xf32>
    %60 = arith.addf %53, %59 : vector<8x128xf32>
    %c0_37 = arith.constant 0 : index
    %c0_38 = arith.constant 0 : index
    %61 = vector.load %arg6[%c0_37, %c0_38] : memref<8x128xf32, #tpu.memory_space<vmem>>, vector<8x128xf32>
    tpu.vector_store %arg6[%c0_37, %c0_38], %60 {strides = array<i32>} : memref<8x128xf32, #tpu.memory_space<vmem>>, vector<8x128xf32>,
    return
  }
}

</mosaic_0001>

<llo_original>
// kernel: fused_concept_logits.1
$region0: #{fused_concept_logits.1}
  #allocation0 [shape = 'u32[]', space=smem, size = 0x4, offset = 0x4, fixed_abs, tag = 'smem constant byte address 0x4 - core index']
  #allocation1 [shape = 'u32[72,128]{1,0:T(1,128)}', space=vmem, size = 0x9000, scoped, tag = 'internal scratch']
  %s0 = inlined_call_operand.vmem [shape: bf16[8,32], index: 0, kind: input, shape index: {}]
  %s1 = inlined_call_operand.vmem [shape: bf16[2,32,16], index: 1, kind: input, shape index: {}]
  %s2 = inlined_call_operand.vmem [shape: f32[2,1,16], index: 2, kind: input, shape index: {}]
  %s3 = inlined_call_operand.vmem [shape: bf16[2,16,128], index: 3, kind: input, shape index: {}]
  %s4 = inlined_call_operand.vmem [shape: f32[2,1,128], index: 4, kind: input, shape index: {}]
  %s5 = inlined_call_operand.vmem [shape: f32[2,8,128], index: 5, kind: output, shape index: {0}]
  %s6 = inlined_call_operand.vmem [shape: f32[8,128], index: 6, kind: output, shape index: {1}]
  %7 = xla_tuple %s5, %s6
  %s8 = sld [smem:[#allocation0]]
  $region38: #{fused_concept_logits.1} parent=0
    _
  %s10 = ssub.s32 1, %s8
  %s11 = scalar_select 0, %s10, %s8
  // Predicated region
  $region2: #{fused_concept_logits.1} parent=0 // pred_check
    _
  $region3: #{fused_concept_logits.1} parent=0 // pred_check_branch
    %13 = sbr.rel (0) target = $region5
  $region4: #{fused_concept_logits.1} parent=0 // pred_region
    _
  $region5: #{fused_concept_logits.1} parent=0 // pred_fallthru
    _
  // Predicated region
  $region6: #{fused_concept_logits.1} parent=0 // pred_check
    _
  $region7: #{fused_concept_logits.1} parent=0 // pred_check_branch
    %15 = sbr.rel (0) target = $region9
  $region8: #{fused_concept_logits.1} parent=0 // pred_region
    _
  $region9: #{fused_concept_logits.1} parent=0 // pred_fallthru
    _
  // Predicated region
  $region10: #{fused_concept_logits.1} parent=0 // pred_check
    _
  $region11: #{fused_concept_logits.1} parent=0 // pred_check_branch
    %17 = sbr.rel (0) target = $region13
  $region12: #{fused_concept_logits.1} parent=0 // pred_region
    _
  $region13: #{fused_concept_logits.1} parent=0 // pred_fallthru
    _
  // Predicated region
  $region14: #{fused_concept_logits.1} parent=0 // pred_check
    _
  $region15: #{fused_concept_logits.1} parent=0 // pred_check_branch
    %19 = sbr.rel (0) target = $region17
  $region16: #{fused_concept_logits.1} parent=0 // pred_region
    _
  $region17: #{fused_concept_logits.1} parent=0 // pred_fallthru
    _
  // Predicated region
  $region18: #{fused_concept_logits.1} parent=0 // pred_check
    _
  $region19: #{fused_concept_logits.1} parent=0 // pred_check_branch
    %21 = sbr.rel (0) target = $region21
  $region20: #{fused_concept_logits.1} parent=0 // pred_region
    _
  $region21: #{fused_concept_logits.1} parent=0 // pred_fallthru
    _
  %v23 = vld [vmem:[%s0] sm:$0xf]
  %v24 = vld [vmem:[%s1] sm:$0xf]
  %v25 = vld [vmem:[%s1 + $0x4] sm:$0xf]
  %v26 = vld [vmem:[%s1 + $0x8] sm:$0xf]
  %v27 = vld [vmem:[%s1 + $0xc] sm:$0xf]
  %v28 = vld [vmem:[%s2] sm:$0x1]
  %v30 = vperm.slane %v28, 0
  %v36 = vunpack.c.l.b16 %v24
  %v37 = vunpack.c.l.b16 %v25
  %v38 = vunpack.c.l.b16 %v26
  %v39 = vunpack.c.l.b16 %v27
  %v40 = vpack.c.b16 %v37, %v36
  %v41 = vpack.c.b16 %v39, %v38
  %vm44 = vcmask 261120
  %v46 = vsel %vm44, %v23, 0
  %48 = vmatpush.bf16.msra.mxu0 0
  %49 = vmatpush.bf16.msra.mxu0 0
  %50 = vmatpush.bf16.msra.mxu0 0
  %51 = vmatpush.bf16.msra.mxu0 0
  %52 = vmatpush.bf16.msra.mxu0 0
  %53 = vmatpush.bf16.msra.mxu0 0
  %54 = vmatpush.bf16.msra.mxu0 %v41
  %55 = vmatpush.bf16.msra.mxu0 %v40
  %56 = vmatmul.bf16.gmra.mxu0 %v46
  %v57 = vpop.f32.mrf.mxu0
  %v58 = vadd.f32 %v30, %v57
  %v59 = vpop.f32.mrf.mxu0
  %60 = vdwg.mxu0
  %v61 = vmul.f32 %v58, %v58
  %vm62 = vcmask 130048
  %v63 = vsel %vm62, %v61, 0.0
  %64 = vadd.xlane.f32.xlu0 %v63
  %v65 = vpop.xlane.xlu0 %64
  %v66 = vadd.f32 %v65, 1e-08
  %v67 = vrsqrt.pop %v66
  %v68 = vmul.f32 %v67, %v66
  %v69 = vmul.f32 %v68, %v67
  %v70 = vmul.f32 0.5, %v69
  %v71 = vsub.f32 1.5, %v70
  %v72 = vmul.f32 %v67, %v71
  %vm73 = vweird.f32 %v66
  %vm74 = vweird.f32 %v67
  %vm75 = vmor %vm73, %vm74
  %v76 = vsel %vm75, %v67, %v72
  %v77 = vmul.f32 %v58, %v76
  %v78 = vpack.c.bf16 %v77, %v77
  %v79 = vld [vmem:[%s3] sm:$0xf]
  %v80 = vld [vmem:[%s3 + $0x4] sm:$0xf]
  %v81 = vld [vmem:[%s4] sm:$0x1]
  %v83 = vperm.slane %v81, 0
  %v87 = vunpack.c.l.b16 %v79
  %v88 = vunpack.c.l.b16 %v80
  %v89 = vpack.c.b16 %v88, %v87
  %v92 = vsel %vm62, %v78, 0
  %94 = vmatpush.bf16.msra.mxu0 0
  %95 = vmatpush.bf16.msra.mxu0 0
  %96 = vmatpush.bf16.msra.mxu0 0
  %97 = vmatpush.bf16.msra.mxu0 0
  %98 = vmatpush.bf16.msra.mxu0 0
  %99 = vmatpush.bf16.msra.mxu0 0
  %100 = vmatpush.bf16.msra.mxu0 0
  %101 = vmatpush.bf16.msra.mxu0 %v89
  %102 = vmatmul.bf16.gmra.mxu0 %v92
  %v103 = vpop.f32.mrf.mxu0
  %v104 = vadd.f32 %v83, %v103
  %v105 = vpop.f32.mrf.mxu0
  %106 = vdwg.mxu0
  %107 = vst [vmem:[%s5] sm:$0xff] %v104
  %s108 = scalar_lea.vmem %s1, 16
  %v109 = vld [vmem:[%s108] sm:$0xf]
  %v110 = vld [vmem:[%s108 + $0x4] sm:$0xf]
  %v111 = vld [vmem:[%s108 + $0x8] sm:$0xf]
  %v112 = vld [vmem:[%s108 + $0xc] sm:$0xf]
  %s113 = scalar_lea.vmem %s2, 1
  %v114 = vld [vmem:[%s113] sm:$0x1]
  %v116 = vperm.slane %v114, 0
  %v122 = vunpack.c.l.b16 %v109
  %v123 = vunpack.c.l.b16 %v110
  %v124 = vunpack.c.l.b16 %v111
  %v125 = vunpack.c.l.b16 %v112
  %v126 = vpack.c.b16 %v123, %v122
  %v127 = vpack.c.b16 %v125, %v124
  %130 = vmatpush.bf16.msra.mxu0 0
  %131 = vmatpush.bf16.msra.mxu0 0
  %132 = vmatpush.bf16.msra.mxu0 0
  %133 = vmatpush.bf16.msra.mxu0 0
  %134 = vmatpush.bf16.msra.mxu0 0
  %135 = vmatpush.bf16.msra.mxu0 0
  %136 = vmatpush.bf16.msra.mxu0 %v127
  %137 = vmatpush.bf16.msra.mxu0 %v126
  %138 = vmatmul.bf16.gmra.mxu0 %v46
  %v139 = vpop.f32.mrf.mxu0
  %v140 = vadd.f32 %v116, %v139
  %v141 = vpop.f32.mrf.mxu0
  %142 = vdwg.mxu0
  %v143 = vmul.f32 %v140, %v140
  %v144 = vsel %vm62, %v143, 0.0
  %145 = vadd.xlane.f32.xlu0 %v144
  %v146 = vpop.xlane.xlu0 %145
  %v147 = vadd.f32 %v146, 1e-08
  %v148 = vrsqrt.pop %v147
  %v149 = vmul.f32 %v148, %v147
  %v150 = vmul.f32 %v149, %v148
  %v151 = vmul.f32 0.5, %v150
  %v152 = vsub.f32 1.5, %v151
  %v153 = vmul.f32 %v148, %v152
  %vm154 = vweird.f32 %v147
  %vm155 = vweird.f32 %v148
  %vm156 = vmor %vm154, %vm155
  %v157 = vsel %vm156, %v148, %v153
  %v158 = vmul.f32 %v140, %v157
  %v159 = vpack.c.bf16 %v158, %v158
  %s160 = scalar_lea.vmem %s3, 8
  %v161 = vld [vmem:[%s160] sm:$0xf]
  %v162 = vld [vmem:[%s160 + $0x4] sm:$0xf]
  %s163 = scalar_lea.vmem %s4, 1
  %v164 = vld [vmem:[%s163] sm:$0x1]
  %v166 = vperm.slane %v164, 0
  %v170 = vunpack.c.l.b16 %v161
  %v171 = vunpack.c.l.b16 %v162
  %v172 = vpack.c.b16 %v171, %v170
  %v175 = vsel %vm62, %v159, 0
  %177 = vmatpush.bf16.msra.mxu0 0
  %178 = vmatpush.bf16.msra.mxu0 0
  %179 = vmatpush.bf16.msra.mxu0 0
  %180 = vmatpush.bf16.msra.mxu0 0
  %181 = vmatpush.bf16.msra.mxu0 0
  %182 = vmatpush.bf16.msra.mxu0 0
  %183 = vmatpush.bf16.msra.mxu0 0
  %184 = vmatpush.bf16.msra.mxu0 %v172
  %185 = vmatmul.bf16.gmra.mxu0 %v175
  %v186 = vpop.f32.mrf.mxu0
  %v187 = vadd.f32 %v166, %v186
  %v188 = vpop.f32.mrf.mxu0
  %189 = vdwg.mxu0
  %s190 = scalar_lea.vmem %s5, 8
  %191 = vst [vmem:[%s190] sm:$0xff] %v187
  %v192 = vmax.f32 %v104, %v187
  %v193 = vsub.f32 %v104, %v192
  %v194 = vmul.f32 %v193, 1.442695
  %v195 = vpow.pop %v194
  %v196 = vsub.f32 %v187, %v192
  %v197 = vmul.f32 %v196, 1.442695
  %v198 = vpow.pop %v197
  %v199 = vadd.f32 %v195, %v198
  %v200 = vlog2.pop %v199
  %v201 = vmul.f32 %v200, 0.6931472
  %v202 = vadd.f32 %v192, %v201
  %203 = vst [vmem:[%s6] sm:$0xff] %v202
  // Predicated region
  $region22: #{fused_concept_logits.1} parent=0 // pred_check
    _
  $region23: #{fused_concept_logits.1} parent=0 // pred_check_branch
    %205 = sbr.rel (0) target = $region25
  $region24: #{fused_concept_logits.1} parent=0 // pred_region
    _
  $region25: #{fused_concept_logits.1} parent=0 // pred_fallthru
    _
  // Predicated region
  $region26: #{fused_concept_logits.1} parent=0 // pred_check
    _
  $region27: #{fused_concept_logits.1} parent=0 // pred_check_branch
    %207 = sbr.rel (0) target = $region29
  $region28: #{fused_concept_logits.1} parent=0 // pred_region
    _
  $region29: #{fused_concept_logits.1} parent=0 // pred_fallthru
    _
  // Predicated region
  $region30: #{fused_concept_logits.1} parent=0 // pred_check
    _
  $region31: #{fused_concept_logits.1} parent=0 // pred_check_branch
    %209 = sbr.rel (0) target = $region33
  $region32: #{fused_concept_logits.1} parent=0 // pred_region
    _
  $region33: #{fused_concept_logits.1} parent=0 // pred_fallthru
    _
  // Predicated region
  $region34: #{fused_concept_logits.1} parent=0 // pred_check
    _
  $region35: #{fused_concept_logits.1} parent=0 // pred_check_branch
    %211 = sbr.rel (0) target = $region37
  $region36: #{fused_concept_logits.1} parent=0 // pred_region
    _
  $region37: #{fused_concept_logits.1} parent=0 // pred_fallthru
    _

</llo_original>
